<compile_context>
chip_gen: v7x
topology: tpu7x:2x2x1
jax: 0.10.0
libtpu: 0.0.40
codegen_flags: <defaults>
</compile_context>

<pallas_src>
import functools
import math

import jax
import jax.numpy as jnp
from jax.experimental import pallas as pl
from jax.experimental.pallas import tpu as pltpu


_COMPILER_PARAMS = pltpu.CompilerParams(
    dimension_semantics=("parallel", "parallel"),
    vmem_limit_bytes=48 * 1024 * 1024,
)


def _pick_rows(total, width, target_pix):
    """Divisor of `total` giving ~target_pix pixels/tile, avoiding degenerate tiles."""
    divs = [d for d in range(1, total + 1)
            if total % d == 0 and (d == total or (d * width) % 8 == 0)]
    good = [d for d in divs if d * width <= target_pix and d >= min(total, 8)]
    if good:
        return max(good)
    ok = [d for d in divs if d >= min(total, 8)]
    return min(ok) if ok else total


# ----------------------------------------------------------------------------
# Down block: 3x3 conv, stride 2, pad 1, bias + LeakyReLU(0.2)
#
# Input arrives as three row-parity planes in "column-pair" view (2C lanes):
#   E[i]  = x[2i]      (conv row tap di=1)
#   OT[i] = x[2i-1]    (di=0, zero row at i=0)
#   OB[i] = x[2i+1]    (di=2)
# each left-padded by one column pair.  Tap order must match _pack_down.
# ----------------------------------------------------------------------------
def _down_kernel(e_ref, ot_ref, ob_ref, w_ref, b_ref, o_ref, *, Wo):
    TH = e_ref.shape[0]
    C2 = e_ref.shape[-1]
    M = TH * Wo
    taps = []
    for p_ref in (ot_ref, e_ref, ob_ref):        # di = 0, 1, 2
        for co in (0, 1):                        # column pair j-1, j
            taps.append(p_ref[:, co:co + Wo, :].reshape(M, C2))
    cols = jnp.concatenate(taps, axis=-1)        # (M, 6*2C) im2col in VMEM
    acc = jnp.dot(cols, w_ref[...], preferred_element_type=jnp.float32)
    y = acc + b_ref[...]                         # fused bias epilogue
    y = jnp.where(y > 0, y, 0.2 * y)             # LeakyReLU(0.2)
    o_ref[...] = y.astype(o_ref.dtype)


def conv_down_block(x, w6, b_row, *, target_pix=8192):
    """NHWC bf16 (N,H,W,C) -> NHWC bf16 (N,H/2,W/2,Cout)."""
    N, H, W, C = x.shape
    assert H % 2 == 0 and W % 2 == 0
    Ho, Wo = H // 2, W // 2
    C2 = 2 * C
    Cout = w6.shape[-1]

    xp = x.reshape(N, H, Wo, C2)                 # pair adjacent columns (free)
    E = xp[:, 0::2]
    OB = xp[:, 1::2]
    OT = jnp.concatenate(
        [jnp.zeros((N, 1, Wo, C2), xp.dtype), OB[:, :-1]], axis=1)
    pad = ((0, 0), (0, 0), (1, 0), (0, 0))       # one zero column-pair on the left
    E = jnp.pad(E, pad)
    OT = jnp.pad(OT, pad)
    OB = jnp.pad(OB, pad)

    TH = _pick_rows(Ho, Wo, target_pix)
    grid = (N, Ho // TH)
    plane_spec = pl.BlockSpec((None, TH, Wo + 1, C2), lambda n, t: (n, t, 0, 0))
    kernel = functools.partial(_down_kernel, Wo=Wo)

    out = pl.pallas_call(
        kernel,
        out_shape=jax.ShapeDtypeStruct((N, Ho * Wo, Cout), jnp.bfloat16),
        grid=grid,
        in_specs=[
            plane_spec, plane_spec, plane_spec,
            pl.BlockSpec((6 * C2, Cout), lambda n, t: (0, 0)),
            pl.BlockSpec((1, Cout), lambda n, t: (0, 0)),
        ],
        out_specs=pl.BlockSpec((None, TH * Wo, Cout), lambda n, t: (n, t, 0)),
        compiler_params=_COMPILER_PARAMS,
    )(E, OT, OB, w6, b_row)
    return out.reshape(N, Ho, Wo, Cout)


# ----------------------------------------------------------------------------
# Up block: 2x nearest upsample -> 3x3 conv s1 p1 + bias + LeakyReLU(0.2)
# + residual, as a subpixel (parity) decomposition.
#
# Low-res input arrives as three row-shifted, column-padded planes:
#   LC[i] = low[i], LT[i] = low[i-1], LB[i] = low[i+1]   (zeros past the edge)
# For output-row parity pr the kernel builds a 6-tap im2col (outer row plane,
# then center row plane, each at col offsets 0..2) and multiplies by a
# (384, 128) weight whose 128 columns are [pc=0 | pc=1] outputs, so adjacent
# output columns come out channel-concatenated (lane dense, no shuffles).
# ----------------------------------------------------------------------------
def _up_kernel(lt_ref, lc_ref, lb_ref, w_ref, b_ref, r_ref, o_ref, *, Wl):
    THl = lt_ref.shape[0]
    C = lt_ref.shape[-1]
    Ml = THl * Wl
    center = [lc_ref[:, b:b + Wl, :].reshape(Ml, C) for b in range(3)]
    for pr, outer_ref in ((0, lt_ref), (1, lb_ref)):
        outer = [outer_ref[:, b:b + Wl, :].reshape(Ml, C) for b in range(3)]
        cols = jnp.concatenate(outer + center, axis=-1)       # (Ml, 6*C)
        acc = jnp.dot(cols, w_ref[pr], preferred_element_type=jnp.float32)
        y = acc + b_ref[...]
        y = jnp.where(y > 0, y, 0.2 * y).astype(o_ref.dtype)
        y = y.reshape(THl, Wl, o_ref.shape[-1]) + r_ref[:, pr, :, :]  # bf16 residual
        o_ref[:, pr, :, :] = y


def conv_up_block(x_low, residual, wup, b2, *, target_pix=2048):
    """NHWC bf16 (N,Hl,Wl,C) + residual (N,2Hl,2Wl,Cout) -> (N,2Hl,2Wl,Cout)."""
    N, Hl, Wl, C = x_low.shape
    Cout = b2.shape[-1] // 2

    LC = jnp.pad(x_low, ((0, 0), (0, 0), (1, 1), (0, 0)))     # (N, Hl, Wl+2, C)
    z = jnp.zeros((N, 1, Wl + 2, C), LC.dtype)
    LT = jnp.concatenate([z, LC[:, :-1]], axis=1)
    LB = jnp.concatenate([LC[:, 1:], z], axis=1)
    res5 = residual.reshape(N, Hl, 2, Wl, 2 * Cout)           # free reshape

    THl = _pick_rows(Hl, Wl, target_pix)
    grid = (N, Hl // THl)
    plane_spec = pl.BlockSpec((None, THl, Wl + 2, C), lambda n, t: (n, t, 0, 0))
    io_spec = pl.BlockSpec((None, THl, 2, Wl, 2 * Cout),
                           lambda n, t: (n, t, 0, 0, 0))
    kernel = functools.partial(_up_kernel, Wl=Wl)

    out = pl.pallas_call(
        kernel,
        out_shape=jax.ShapeDtypeStruct((N, Hl, 2, Wl, 2 * Cout), jnp.bfloat16),
        grid=grid,
        in_specs=[
            plane_spec, plane_spec, plane_spec,
            pl.BlockSpec((2, 6 * C, 2 * Cout), lambda n, t: (0, 0, 0)),
            pl.BlockSpec((1, 2 * Cout), lambda n, t: (0, 0)),
            io_spec,
        ],
        out_specs=io_spec,
        compiler_params=_COMPILER_PARAMS,
    )(LT, LC, LB, wup, b2, res5)
    return out.reshape(N, 2 * Hl, 2 * Wl, Cout)


# ----------------------------------------------------------------------------
# Weight packing (done once).  PyTorch conv weight is (Cout, Cin, 3, 3).
# ----------------------------------------------------------------------------
def _pack_down(Wt):
    """(3,3,Cin,Cout) -> (6*2*Cin, Cout); tap order (di, col-pair) = (0,0),(0,1),...,(2,1)."""
    z = jnp.zeros_like(Wt[0, 0])
    blocks = []
    for di in range(3):
        blocks.append(jnp.concatenate([z, Wt[di, 0]], axis=0))           # pair j-1: odd col only
        blocks.append(jnp.concatenate([Wt[di, 1], Wt[di, 2]], axis=0))   # pair j: even | odd col
    return jnp.concatenate(blocks, axis=0)


def _pack_up(Wt):
    """(3,3,Cin,Cout) -> (2, 6*Cin, 2*Cout); per output-row parity pr, taps
    [outer row x cols 0..2, center row x cols 0..2], columns [pc=0 | pc=1]."""
    z = jnp.zeros_like(Wt[0, 0])
    mats = []
    for pr in range(2):
        if pr == 0:
            r_outer, r_center = Wt[0], Wt[1] + Wt[2]
        else:
            r_outer, r_center = Wt[2], Wt[0] + Wt[1]
        blocks = []
        for Rg in (r_outer, r_center):
            col_blocks = [
                jnp.concatenate([Rg[0], z], axis=1),                      # low col j-1
                jnp.concatenate([Rg[1] + Rg[2], Rg[0] + Rg[1]], axis=1),  # low col j
                jnp.concatenate([z, Rg[2]], axis=1),                      # low col j+1
            ]
            blocks.append(jnp.concatenate(col_blocks, axis=0))
        mats.append(jnp.concatenate(blocks, axis=0))
    return jnp.stack(mats, axis=0)


def pack_params(params):
    packed = {}
    for name, (w, b) in params.items():
        Wt = jnp.transpose(w, (2, 3, 1, 0))                   # (3,3,Cin,Cout)
        if name in ("conv0", "conv1"):
            packed[name] = (_pack_down(Wt).astype(jnp.bfloat16),
                            b.reshape(1, -1).astype(jnp.float32))
        else:
            packed[name] = (_pack_up(Wt).astype(jnp.bfloat16),
                            jnp.concatenate([b, b]).reshape(1, -1).astype(jnp.float32))
    return packed


# ----------------------------------------------------------------------------
# DetailUnet forward (NCHW in / NCHW out, PyTorch convention)
# ----------------------------------------------------------------------------
def detail_unet_forward(packed, x_nchw, *, down_pix=8192, up_pix=2048):
    x = jnp.transpose(x_nchw, (0, 2, 3, 1)).astype(jnp.bfloat16)       # NHWC bf16
    x0 = conv_down_block(x, *packed["conv0"], target_pix=down_pix)     # H   -> H/2
    x1 = conv_down_block(x0, *packed["conv1"], target_pix=down_pix)    # H/2 -> H/4
    x2 = conv_up_block(x1, x0, *packed["conv2"], target_pix=up_pix)    # H/4 -> H/2, + x0
    x3 = conv_up_block(x2, x, *packed["conv3"], target_pix=up_pix)     # H/2 -> H,   + x
    return jnp.transpose(x3, (0, 3, 1, 2)).astype(jnp.float32)


def init_detail_unet(key, channels=64):
    def init_conv(k, cout, cin, ksz=3):
        wk, bk = jax.random.split(k)
        fan_in = cin * ksz * ksz
        w = jax.random.normal(wk, (cout, cin, ksz, ksz), jnp.float32) / math.sqrt(fan_in)
        b = 0.01 * jax.random.normal(bk, (cout,), jnp.float32)
        return w, b

    keys = jax.random.split(key, 4)
    return {
        "conv0": init_conv(keys[0], channels, channels),  # ConvDownBlock(64, 64, 256)
        "conv1": init_conv(keys[1], channels, channels),  # ConvDownBlock(64, 64, 128)
        "conv2": init_conv(keys[2], channels, channels),  # ConvUpBlock(64, 64, 128)
        "conv3": init_conv(keys[3], channels, channels),  # ConvUpBlock(64, 64, 256)
    }


# ----------------------------------------------------------------------------
# Pure-JAX f32 reference (correctness check only)
# ----------------------------------------------------------------------------
def _ref_conv(x, w, b, stride):
    y = jax.lax.conv_general_dilated(
        x, w, (stride, stride), ((1, 1), (1, 1)),
        dimension_numbers=("NCHW", "OIHW", "NCHW"))
    y = y + b[None, :, None, None]
    return jnp.where(y > 0, y, 0.2 * y)


def _ref_forward(params, x):
    x0 = _ref_conv(x, *params["conv0"], 2)
    x1 = _ref_conv(x0, *params["conv1"], 2)
    x2 = _ref_conv(jnp.repeat(jnp.repeat(x1, 2, 2), 2, 3), *params["conv2"], 1) + x0
    x3 = _ref_conv(jnp.repeat(jnp.repeat(x2, 2, 2), 2, 3), *params["conv3"], 1) + x
    return x3


def _check(name, got, want):
    err = float(jnp.max(jnp.abs(got - want)))
    scale = float(jnp.max(jnp.abs(want)))
    # bf16 activations/weights with f32 accumulation: ~5% of the range.
    assert err <= 0.05 * scale + 5e-2, (name, err, scale)


if __name__ == "__main__":
    # Channels are fixed at 64 by the module definition; spatial kept small.
    N, C, H, W = 2, 64, 16, 16
    x = jax.random.normal(jax.random.PRNGKey(0), (N, C, H, W), jnp.float32)
    params = init_detail_unet(jax.random.PRNGKey(42), channels=C)
    packed = pack_params(params)

    # Per-block unit checks -------------------------------------------------
    xh = jnp.transpose(x, (0, 2, 3, 1)).astype(jnp.bfloat16)
    d_got = conv_down_block(xh, *packed["conv0"])
    _check("down_block",
           jnp.transpose(d_got.astype(jnp.float32), (0, 3, 1, 2)),
           _ref_conv(x, *params["conv0"], 2))

    low = jax.random.normal(jax.random.PRNGKey(1), (N, C, H // 2, W // 2), jnp.float32)
    res = jax.random.normal(jax.random.PRNGKey(2), (N, C, H, W), jnp.float32)
    u_got = conv_up_block(jnp.transpose(low, (0, 2, 3, 1)).astype(jnp.bfloat16),
                          jnp.transpose(res, (0, 2, 3, 1)).astype(jnp.bfloat16),
                          *packed["conv3"])
    u_ref = _ref_conv(jnp.repeat(jnp.repeat(low, 2, 2), 2, 3), *params["conv3"], 1) + res
    _check("up_block",
           jnp.transpose(u_got.astype(jnp.float32), (0, 3, 1, 2)), u_ref)

    # Full forward, small shape ---------------------------------------------
    fwd = jax.jit(detail_unet_forward, static_argnames=("down_pix", "up_pix"))
    y = fwd(packed, x)
    jax.block_until_ready(y)
    assert y.shape == (N, C, H, W), y.shape
    _check("forward_16", y, _ref_forward(params, x))

    # Larger shape with tiny tile targets: forces multiple row tiles per image
    x2 = jax.random.normal(jax.random.PRNGKey(3), (1, C, 32, 32), jnp.float32)
    y2 = fwd(packed, x2, down_pix=128, up_pix=64)
    jax.block_until_ready(y2)
    _check("forward_32_tiled", y2, _ref_forward(params, x2))

    print("KERNEL_OK")
</pallas_src>

<mosaic_0001>
module attributes {stable_mosaic.version = 11 : i64} {
  func.func @_down_kernel(%arg0: i32, %arg1: i32, %arg2: memref<1x8x9x128xbf16, #tpu.memory_space<vmem>>, %arg3: memref<1x8x9x128xbf16, #tpu.memory_space<vmem>>, %arg4: memref<1x8x9x128xbf16, #tpu.memory_space<vmem>>, %arg5: memref<768x64xbf16, #tpu.memory_space<vmem>>, %arg6: memref<1x64xf32, #tpu.memory_space<vmem>>, %arg7: memref<1x64x64xbf16, #tpu.memory_space<vmem>>) attributes {dimension_semantics = [#tpu.dimension_semantics<parallel>, #tpu.dimension_semantics<parallel>], iteration_bounds = array<i64: 2, 1>, scalar_prefetch = 0 : i64, scratch_operands = 0 : i64, tpu.core_type = #tpu.core_type<tc>, window_params = [{transform_indices = @transform_0, window_bounds = array<i64: 1, 8, 9, 128>}, {transform_indices = @transform_1, window_bounds = array<i64: 1, 8, 9, 128>}, {transform_indices = @transform_2, window_bounds = array<i64: 1, 8, 9, 128>}, {pipeline_mode = #tpu.pipeline_mode<synchronous>, transform_indices = @transform_3, window_bounds = array<i64: 768, 64>}, {pipeline_mode = #tpu.pipeline_mode<synchronous>, transform_indices = @transform_4, window_bounds = array<i64: 1, 64>}, {transform_indices = @transform_5, window_bounds = array<i64: 1, 64, 64>}]} {
    %c0 = arith.constant 0 : index
    %c0_0 = arith.constant 0 : index
    %c0_1 = arith.constant 0 : index
    %c0_2 = arith.constant 0 : index
    %0 = vector.load %arg3[%c0, %c0_0, %c0_1, %c0_2] : memref<1x8x9x128xbf16, #tpu.memory_space<vmem>>, vector<1x8x8x128xbf16>
    %1 = vector.shape_cast %0 : vector<1x8x8x128xbf16> to vector<8x8x128xbf16>
    %2 = vector.shape_cast %1 : vector<8x8x128xbf16> to vector<64x128xbf16>
    %c0_3 = arith.constant 0 : index
    %c0_4 = arith.constant 0 : index
    %c1 = arith.constant 1 : index
    %c0_5 = arith.constant 0 : index
    %3 = vector.load %arg3[%c0_3, %c0_4, %c1, %c0_5] : memref<1x8x9x128xbf16, #tpu.memory_space<vmem>>, vector<1x8x8x128xbf16>
    %4 = vector.shape_cast %3 : vector<1x8x8x128xbf16> to vector<8x8x128xbf16>
    %5 = vector.shape_cast %4 : vector<8x8x128xbf16> to vector<64x128xbf16>
    %c0_6 = arith.constant 0 : index
    %c0_7 = arith.constant 0 : index
    %c0_8 = arith.constant 0 : index
    %c0_9 = arith.constant 0 : index
    %6 = vector.load %arg2[%c0_6, %c0_7, %c0_8, %c0_9] : memref<1x8x9x128xbf16, #tpu.memory_space<vmem>>, vector<1x8x8x128xbf16>
    %7 = vector.shape_cast %6 : vector<1x8x8x128xbf16> to vector<8x8x128xbf16>
    %8 = vector.shape_cast %7 : vector<8x8x128xbf16> to vector<64x128xbf16>
    %c0_10 = arith.constant 0 : index
    %c0_11 = arith.constant 0 : index
    %c1_12 = arith.constant 1 : index
    %c0_13 = arith.constant 0 : index
    %9 = vector.load %arg2[%c0_10, %c0_11, %c1_12, %c0_13] : memref<1x8x9x128xbf16, #tpu.memory_space<vmem>>, vector<1x8x8x128xbf16>
    %10 = vector.shape_cast %9 : vector<1x8x8x128xbf16> to vector<8x8x128xbf16>
    %11 = vector.shape_cast %10 : vector<8x8x128xbf16> to vector<64x128xbf16>
    %c0_14 = arith.constant 0 : index
    %c0_15 = arith.constant 0 : index
    %c0_16 = arith.constant 0 : index
    %c0_17 = arith.constant 0 : index
    %12 = vector.load %arg4[%c0_14, %c0_15, %c0_16, %c0_17] : memref<1x8x9x128xbf16, #tpu.memory_space<vmem>>, vector<1x8x8x128xbf16>
    %13 = vector.shape_cast %12 : vector<1x8x8x128xbf16> to vector<8x8x128xbf16>
    %14 = vector.shape_cast %13 : vector<8x8x128xbf16> to vector<64x128xbf16>
    %c0_18 = arith.constant 0 : index
    %c0_19 = arith.constant 0 : index
    %c1_20 = arith.constant 1 : index
    %c0_21 = arith.constant 0 : index
    %15 = vector.load %arg4[%c0_18, %c0_19, %c1_20, %c0_21] : memref<1x8x9x128xbf16, #tpu.memory_space<vmem>>, vector<1x8x8x128xbf16>
    %16 = vector.shape_cast %15 : vector<1x8x8x128xbf16> to vector<8x8x128xbf16>
    %17 = vector.shape_cast %16 : vector<8x8x128xbf16> to vector<64x128xbf16>
    %18 = tpu.concatenate %2, %5, %8, %11, %14, %17 in 1 : vector<64x128xbf16>, vector<64x128xbf16>, vector<64x128xbf16>, vector<64x128xbf16>, vector<64x128xbf16>, vector<64x128xbf16> -> vector<64x768xbf16>
    %c0_22 = arith.constant 0 : index
    %c0_23 = arith.constant 0 : index
    %19 = vector.load %arg5[%c0_22, %c0_23] : memref<768x64xbf16, #tpu.memory_space<vmem>>, vector<768x64xbf16>
    %cst = arith.constant dense<0.000000e+00> : vector<64x64xf32>
    %20 = tpu.matmul %18, %19, %cst {dimension_numbers = #tpu.dot_dimension_numbers<[1], [0], [0], [1], [0, 0, 1, 1], [], []>} : vector<64x768xbf16>, vector<768x64xbf16>, vector<64x64xf32> -> vector<64x64xf32>
    %c0_24 = arith.constant 0 : index
    %c0_25 = arith.constant 0 : index
    %21 = vector.load %arg6[%c0_24, %c0_25] : memref<1x64xf32, #tpu.memory_space<vmem>>, vector<1x64xf32>
    %22 = vector.broadcast %21 : vector<1x64xf32> to vector<64x64xf32>
    %23 = arith.addf %20, %22 : vector<64x64xf32>
    %cst_26 = arith.constant 0.000000e+00 : f32
    %24 = vector.broadcast %cst_26 : f32 to vector<64x64xf32>
    %25 = arith.cmpf ogt, %23, %24 : vector<64x64xf32>
    %cst_27 = arith.constant 2.000000e-01 : f32
    %26 = vector.broadcast %cst_27 : f32 to vector<64x64xf32>
    %27 = arith.mulf %26, %23 : vector<64x64xf32>
    %28 = arith.select %25, %23, %27 : vector<64x64xi1>, vector<64x64xf32>
    %29 = arith.truncf %28 : vector<64x64xf32> to vector<64x64xbf16>
    %c0_28 = arith.constant 0 : index
    %c0_29 = arith.constant 0 : index
    %c0_30 = arith.constant 0 : index
    %30 = vector.load %arg7[%c0_28, %c0_29, %c0_30] : memref<1x64x64xbf16, #tpu.memory_space<vmem>>, vector<1x64x64xbf16>
    %31 = vector.shape_cast %30 : vector<1x64x64xbf16> to vector<64x64xbf16>
    %32 = vector.shape_cast %29 : vector<64x64xbf16> to vector<1x64x64xbf16>
    tpu.vector_store %arg7[%c0_28, %c0_29, %c0_30], %32 {strides = array<i32>} : memref<1x64x64xbf16, #tpu.memory_space<vmem>>, vector<1x64x64xbf16>,
    return
  }
  func.func @transform_0(%arg0: i32, %arg1: i32) -> (i32, i32, i32, i32) {
    %c0_i32 = arith.constant 0 : i32
    %c0_i32_0 = arith.constant 0 : i32
    %c0_i32_1 = arith.constant 0 : i32
    return %arg0, %arg1, %c0_i32, %c0_i32_0 : i32, i32, i32, i32
  }
  func.func @transform_1(%arg0: i32, %arg1: i32) -> (i32, i32, i32, i32) {
    %c0_i32 = arith.constant 0 : i32
    %c0_i32_0 = arith.constant 0 : i32
    %c0_i32_1 = arith.constant 0 : i32
    return %arg0, %arg1, %c0_i32, %c0_i32_0 : i32, i32, i32, i32
  }
  func.func @transform_2(%arg0: i32, %arg1: i32) -> (i32, i32, i32, i32) {
    %c0_i32 = arith.constant 0 : i32
    %c0_i32_0 = arith.constant 0 : i32
    %c0_i32_1 = arith.constant 0 : i32
    return %arg0, %arg1, %c0_i32, %c0_i32_0 : i32, i32, i32, i32
  }
  func.func @transform_3(%arg0: i32, %arg1: i32) -> (i32, i32) {
    %c0_i32 = arith.constant 0 : i32
    %c0_i32_0 = arith.constant 0 : i32
    %c0_i32_1 = arith.constant 0 : i32
    return %c0_i32, %c0_i32_0 : i32, i32
  }
  func.func @transform_4(%arg0: i32, %arg1: i32) -> (i32, i32) {
    %c0_i32 = arith.constant 0 : i32
    %c0_i32_0 = arith.constant 0 : i32
    %c0_i32_1 = arith.constant 0 : i32
    return %c0_i32, %c0_i32_0 : i32, i32
  }
  func.func @transform_5(%arg0: i32, %arg1: i32) -> (i32, i32, i32) {
    %c0_i32 = arith.constant 0 : i32
    %c0_i32_0 = arith.constant 0 : i32
    return %arg0, %arg1, %c0_i32 : i32, i32, i32
  }
}

</mosaic_0001>

<llo_original>
// kernel: tpu_custom_call.1
$region0: #{tpu_custom_call.1}
  #allocation0 [shape = 'u32[]', space=smem, size = 0x4, offset = 0x4, fixed_abs, tag = 'smem constant byte address 0x4 - core index']
  #allocation1 [shape = 'u32[144,128]{1,0:T(1,128)}', space=vmem, size = 0x12000, scoped, tag = 'internal scratch']
  %s0 = inlined_call_operand.vmem [shape: bf16[2,8,9,128], index: 0, kind: input, shape index: {}]
  %s1 = inlined_call_operand.vmem [shape: bf16[2,8,9,128], index: 1, kind: input, shape index: {}]
  %s2 = inlined_call_operand.vmem [shape: bf16[2,8,9,128], index: 2, kind: input, shape index: {}]
  %s3 = inlined_call_operand.vmem [shape: bf16[768,64], index: 3, kind: input, shape index: {}]
  %s4 = inlined_call_operand.vmem [shape: f32[1,64], index: 4, kind: input, shape index: {}]
  %s5 = inlined_call_operand.hbm [shape: bf16[2,64,64], index: 5, kind: output, shape index: {}]
  %s6 = sld [smem:[#allocation0]]
  $region53: #{tpu_custom_call.1} parent=0
    _
  %s8 = ssub.s32 1, %s6
  %s9 = scalar_select 0, %s8, %s6
  $region1: #{tpu_custom_call.1} parent=0
    #allocation2 [shape = 'u8[32768]{0}', space=vmem, size = 0x8000, scoped, tag = 'output window, operand 0']
    #allocation3 [shape = 's32[2]{0}', space=sflag, size = 0x8, scoped, tag = 'scoped memory for tpu_custom_call.1']
    %10 = vsyncpa [#allocation3], 0
    %s11 = scalar_lea.sflag [#allocation3], 1
    %12 = vsyncpa %s11, 0
    loop: start=0, step=1, limit=4
    $region2: #{tpu_custom_call.1} parent=1 // loop_pre_header
      _
    $region3: #{tpu_custom_call.1} parent=1 // loop_header
      %s14 = sphi 0, %s18
      %p15 = scmp.ge.s32.totalorder %s14, 4
      %s21 = sphi 0, %s33
      %s22 = sphi 0, %s29
      %s23 = sphi 0, %s21
      %s24 = sphi 0, %s22
      %s25 = sphi 0, %s23
      %s26 = sphi 0, %s24
      %s38 = sphi 0, %s40
      %s41 = sphi 0, %s38
      %s42 = sphi 0, %s41
      %s58 = sphi 0, %s42
      %s66 = sphi 0, %s68
      %s69 = sphi 0, %s66
      %s70 = sphi 0, %s69
      %s86 = sphi 0, %s70
      %s94 = sphi 0, %s96
      %s97 = sphi 0, %s94
      %s98 = sphi 0, %s97
      %s114 = sphi 0, %s98
      %s118 = sphi 0, %s118
      %s120 = sphi 0, %s118
      %s121 = sphi 0, %s120
      %s135 = sphi 0, %s121
      %s139 = sphi 0, %s139
      %s141 = sphi 0, %s139
      %s142 = sphi 0, %s141
      %s156 = sphi 0, %s142
      %s164 = sphi 0, %s166
      %s167 = sphi 0, %s164
      %s168 = sphi 0, %s167
      %s184 = sphi 0, %s168
    $region4: #{tpu_custom_call.1} parent=1 // loop_header_branch
      %17 = sbr.rel (%p15) target = $region8
    $region5: #{tpu_custom_call.1} parent=1 // loop_body
      %s19 = ssub.s32 %s14, 1
      %s20 = ssub.s32 %s14, 2
      %s27 = sadd.s32 1, %s22
      %p28 = scmp.ge.s32.totalorder %s27, 1
      %s29 = scalar_select %p28, 0, %s27
      %s30 = sadd.s32 1, %s21
      %s31 = scalar_select %p28, %s30, %s21
      %p32 = scmp.ge.s32.totalorder %s31, 2
      %s33 = scalar_select %p32, 0, %s31
      %s34 = ssub.s32 %s21, %s33
      %s35 = ssub.s32 %s22, %s29
      %s36 = sor.u32 %s34, %s35
      %p37 = scmp.eq.s32.totalorder %s36, 0
      %s39 = sadd.s32 %s38, 1
      %s40 = scalar_select %p37, %s38, %s39
      %p43 = pneg %p37
      %p44 = scmp.eq.s32.totalorder %s14, 1
      %p45 = por %p43, %p44
      %p46 = scmp.ne.s32.totalorder %s38, %s41
      %p47 = scmp.eq.s32.totalorder %s14, 0
      %p48 = por %p46, %p47
      %p49 = scmp.ne.s32.totalorder %s38, %s41
      %p50 = scmp.eq.s32.totalorder %s19, 1
      %p51 = por %p49, %p50
      %p52 = scmp.ne.s32.totalorder %s41, %s42
      %p53 = scmp.eq.s32.totalorder %s19, 0
      %p54 = por %p52, %p53
      %p55 = scmp.ne.s32.totalorder %s41, %s42
      %p56 = scmp.eq.s32.totalorder %s20, 1
      %p57 = por %p55, %p56
      %p59 = scmp.ne.s32.totalorder %s42, %s58
      %p60 = scmp.eq.s32.totalorder %s20, 0
      %p61 = por %p59, %p60
      %s62 = ssub.s32 %s21, %s33
      %s63 = ssub.s32 %s22, %s29
      %s64 = sor.u32 %s62, %s63
      %p65 = scmp.eq.s32.totalorder %s64, 0
      %s67 = sadd.s32 %s66, 1
      %s68 = scalar_select %p65, %s66, %s67
      %p71 = pneg %p65
      %p72 = scmp.eq.s32.totalorder %s14, 1
      %p73 = por %p71, %p72
      %p74 = scmp.ne.s32.totalorder %s66, %s69
      %p75 = scmp.eq.s32.totalorder %s14, 0
      %p76 = por %p74, %p75
      %p77 = scmp.ne.s32.totalorder %s66, %s69
      %p78 = scmp.eq.s32.totalorder %s19, 1
      %p79 = por %p77, %p78
      %p80 = scmp.ne.s32.totalorder %s69, %s70
      %p81 = scmp.eq.s32.totalorder %s19, 0
      %p82 = por %p80, %p81
      %p83 = scmp.ne.s32.totalorder %s69, %s70
      %p84 = scmp.eq.s32.totalorder %s20, 1
      %p85 = por %p83, %p84
      %p87 = scmp.ne.s32.totalorder %s70, %s86
      %p88 = scmp.eq.s32.totalorder %s20, 0
      %p89 = por %p87, %p88
      %s90 = ssub.s32 %s21, %s33
      %s91 = ssub.s32 %s22, %s29
      %s92 = sor.u32 %s90, %s91
      %p93 = scmp.eq.s32.totalorder %s92, 0
      %s95 = sadd.s32 %s94, 1
      %s96 = scalar_select %p93, %s94, %s95
      %p99 = pneg %p93
      %p100 = scmp.eq.s32.totalorder %s14, 1
      %p101 = por %p99, %p100
      %p102 = scmp.ne.s32.totalorder %s94, %s97
      %p103 = scmp.eq.s32.totalorder %s14, 0
      %p104 = por %p102, %p103
      %p105 = scmp.ne.s32.totalorder %s94, %s97
      %p106 = scmp.eq.s32.totalorder %s19, 1
      %p107 = por %p105, %p106
      %p108 = scmp.ne.s32.totalorder %s97, %s98
      %p109 = scmp.eq.s32.totalorder %s19, 0
      %p110 = por %p108, %p109
      %p111 = scmp.ne.s32.totalorder %s97, %s98
      %p112 = scmp.eq.s32.totalorder %s20, 1
      %p113 = por %p111, %p112
      %p115 = scmp.ne.s32.totalorder %s98, %s114
      %p116 = scmp.eq.s32.totalorder %s20, 0
      %p117 = por %p115, %p116
      %s119 = sadd.s32 %s118, 1
      %p122 = scmp.eq.s32.totalorder %s14, 1
      %p123 = scmp.ne.s32.totalorder %s118, %s120
      %p124 = scmp.eq.s32.totalorder %s14, 0
      %p125 = por %p123, %p124
      %p126 = scmp.ne.s32.totalorder %s118, %s120
      %p127 = scmp.eq.s32.totalorder %s19, 1
      %p128 = por %p126, %p127
      %p129 = scmp.ne.s32.totalorder %s120, %s121
      %p130 = scmp.eq.s32.totalorder %s19, 0
      %p131 = por %p129, %p130
      %p132 = scmp.ne.s32.totalorder %s120, %s121
      %p133 = scmp.eq.s32.totalorder %s20, 1
      %p134 = por %p132, %p133
      %p136 = scmp.ne.s32.totalorder %s121, %s135
      %p137 = scmp.eq.s32.totalorder %s20, 0
      %p138 = por %p136, %p137
      %s140 = sadd.s32 %s139, 1
      %p143 = scmp.eq.s32.totalorder %s14, 1
      %p144 = scmp.ne.s32.totalorder %s139, %s141
      %p145 = scmp.eq.s32.totalorder %s14, 0
      %p146 = por %p144, %p145
      %p147 = scmp.ne.s32.totalorder %s139, %s141
      %p148 = scmp.eq.s32.totalorder %s19, 1
      %p149 = por %p147, %p148
      %p150 = scmp.ne.s32.totalorder %s141, %s142
      %p151 = scmp.eq.s32.totalorder %s19, 0
      %p152 = por %p150, %p151
      %p153 = scmp.ne.s32.totalorder %s141, %s142
      %p154 = scmp.eq.s32.totalorder %s20, 1
      %p155 = por %p153, %p154
      %p157 = scmp.ne.s32.totalorder %s142, %s156
      %p158 = scmp.eq.s32.totalorder %s20, 0
      %p159 = por %p157, %p158
      %s160 = ssub.s32 %s21, %s33
      %s161 = ssub.s32 %s22, %s29
      %s162 = sor.u32 %s160, %s161
      %p163 = scmp.eq.s32.totalorder %s162, 0
      %s165 = sadd.s32 %s164, 1
      %s166 = scalar_select %p163, %s164, %s165
      %p169 = pneg %p163
      %p170 = scmp.eq.s32.totalorder %s14, 1
      %p171 = por %p169, %p170
      %p172 = scmp.ne.s32.totalorder %s164, %s167
      %p173 = scmp.eq.s32.totalorder %s14, 0
      %p174 = por %p172, %p173
      %p175 = scmp.ne.s32.totalorder %s164, %s167
      %p176 = scmp.eq.s32.totalorder %s19, 1
      %p177 = por %p175, %p176
      %p178 = scmp.ne.s32.totalorder %s167, %s168
      %p179 = scmp.eq.s32.totalorder %s19, 0
      %p180 = por %p178, %p179
      %p181 = scmp.ne.s32.totalorder %s167, %s168
      %p182 = scmp.eq.s32.totalorder %s20, 1
      %p183 = por %p181, %p182
      %p185 = scmp.ne.s32.totalorder %s168, %s184
      %p186 = scmp.eq.s32.totalorder %s20, 0
      %p187 = por %p185, %p186
      %p188 = scmp.le.s32.totalorder 1, %s14
      %p189 = scmp.lt.s32.totalorder %s14, 3
      %p190 = pnand %p188, %p189
      %p191 = pneg %p190
      // Predicated region
      $region9: #{tpu_custom_call.1} parent=5 // pred_check
        _
      $region10: #{tpu_custom_call.1} parent=5 // pred_check_branch
        %193 = sbr.rel (%p190) target = $region12
      $region11: #{tpu_custom_call.1} parent=5 // pred_region
        %s194 = ssub.s32 %s14, 1
        // Predicated region
        $region13: #{tpu_custom_call.1} parent=11 // pred_check
          %p195 = pneg %p131
        $region14: #{tpu_custom_call.1} parent=11 // pred_check_branch
          %197 = sbr.rel (%p195) target = $region16
        $region15: #{tpu_custom_call.1} parent=11 // pred_region
          _
        $region16: #{tpu_custom_call.1} parent=11 // pred_fallthru
          _
        // Predicated region
        $region17: #{tpu_custom_call.1} parent=11 // pred_check
          %p198 = pneg %p152
        $region18: #{tpu_custom_call.1} parent=11 // pred_check_branch
          %200 = sbr.rel (%p198) target = $region20
        $region19: #{tpu_custom_call.1} parent=11 // pred_region
          _
        $region20: #{tpu_custom_call.1} parent=11 // pred_fallthru
          _
      $region12: #{tpu_custom_call.1} parent=5 // pred_fallthru
        _
      %p201 = scmp.lt.s32.totalorder %s14, 2
      // Predicated region
      $region21: #{tpu_custom_call.1} parent=5 // pred_check
        %p202 = pneg %p201
      $region22: #{tpu_custom_call.1} parent=5 // pred_check_branch
        %204 = sbr.rel (%p202) target = $region24
      $region23: #{tpu_custom_call.1} parent=5 // pred_region
        // Predicated region
        $region25: #{tpu_custom_call.1} parent=23 // pred_check
          %p205 = pneg %p48
        $region26: #{tpu_custom_call.1} parent=23 // pred_check_branch
          %207 = sbr.rel (%p205) target = $region28
        $region27: #{tpu_custom_call.1} parent=23 // pred_region
          %s208 = smul.u32 8, %s22
          %p209 = scmp.lt.s32.totalorder %s21, 1
          %s210 = scalar_select %p209, %s21, 1
          %p211 = scmp.lt.s32.totalorder %s208, 7
          %s212 = scalar_select %p211, %s208, 7
          %s213 = smul.addr %s212, 2
          %s214 = smul.addr %s210, 16
          %s215 = sadd.s32 %s213, %s214
          %s216 = smul.addr %s215, 4
          %s217 = scalar_lea.vmem %s0, %s216
          %s218 = smul.u32 8, %s22
        $region28: #{tpu_custom_call.1} parent=23 // pred_fallthru
          _
        // Predicated region
        $region29: #{tpu_custom_call.1} parent=23 // pred_check
          %p219 = pneg %p76
        $region30: #{tpu_custom_call.1} parent=23 // pred_check_branch
          %221 = sbr.rel (%p219) target = $region32
        $region31: #{tpu_custom_call.1} parent=23 // pred_region
          %s222 = smul.u32 8, %s22
          %p223 = scmp.lt.s32.totalorder %s21, 1
          %s224 = scalar_select %p223, %s21, 1
          %p225 = scmp.lt.s32.totalorder %s222, 7
          %s226 = scalar_select %p225, %s222, 7
          %s227 = smul.addr %s226, 2
          %s228 = smul.addr %s224, 16
          %s229 = sadd.s32 %s227, %s228
          %s230 = smul.addr %s229, 4
          %s231 = scalar_lea.vmem %s1, %s230
          %s232 = smul.u32 8, %s22
        $region32: #{tpu_custom_call.1} parent=23 // pred_fallthru
          _
        // Predicated region
        $region33: #{tpu_custom_call.1} parent=23 // pred_check
          %p233 = pneg %p104
        $region34: #{tpu_custom_call.1} parent=23 // pred_check_branch
          %235 = sbr.rel (%p233) target = $region36
        $region35: #{tpu_custom_call.1} parent=23 // pred_region
          %s236 = smul.u32 8, %s22
          %p237 = scmp.lt.s32.totalorder %s21, 1
          %s238 = scalar_select %p237, %s21, 1
          %p239 = scmp.lt.s32.totalorder %s236, 7
          %s240 = scalar_select %p239, %s236, 7
          %s241 = smul.addr %s240, 2
          %s242 = smul.addr %s238, 16
          %s243 = sadd.s32 %s241, %s242
          %s244 = smul.addr %s243, 4
          %s245 = scalar_lea.vmem %s2, %s244
          %s246 = smul.u32 8, %s22
        $region36: #{tpu_custom_call.1} parent=23 // pred_fallthru
          _
      $region24: #{tpu_custom_call.1} parent=5 // pred_fallthru
        _
      %p247 = scmp.le.s32.totalorder 1, %s14
      %p248 = scmp.lt.s32.totalorder %s14, 3
      %p249 = pnand %p247, %p248
      %p250 = pneg %p249
      // Predicated region
      $region37: #{tpu_custom_call.1} parent=5 // pred_check
        _
      $region38: #{tpu_custom_call.1} parent=5 // pred_check_branch
        %252 = sbr.rel (%p249) target = $region40
      $region39: #{tpu_custom_call.1} parent=5 // pred_region
        %s253 = ssub.s32 %s14, 1
        %s254 = smul.u32 8, %s24
        %p255 = scmp.lt.s32.totalorder %s23, 1
        %s256 = scalar_select %p255, %s23, 1
        %p257 = scmp.lt.s32.totalorder %s254, 7
        %s258 = scalar_select %p257, %s254, 7
        %s259 = smul.addr %s258, 2
        %s260 = smul.addr %s256, 16
        %s261 = sadd.s32 %s259, %s260
        %s262 = smul.addr %s261, 4
        %s263 = scalar_lea.vmem %s0, %s262
        %p264 = pneg %p54
        %p265 = pneg %p51
        %s266 = smul.u32 8, %s24
        %p267 = scmp.lt.s32.totalorder %s23, 1
        %s268 = scalar_select %p267, %s23, 1
        %p269 = scmp.lt.s32.totalorder %s266, 7
        %s270 = scalar_select %p269, %s266, 7
        %s271 = smul.addr %s270, 2
        %s272 = smul.addr %s268, 16
        %s273 = sadd.s32 %s271, %s272
        %s274 = smul.addr %s273, 4
        %s275 = scalar_lea.vmem %s1, %s274
        %p276 = pneg %p82
        %p277 = pneg %p79
        %s278 = smul.u32 8, %s24
        %p279 = scmp.lt.s32.totalorder %s23, 1
        %s280 = scalar_select %p279, %s23, 1
        %p281 = scmp.lt.s32.totalorder %s278, 7
        %s282 = scalar_select %p281, %s278, 7
        %s283 = smul.addr %s282, 2
        %s284 = smul.addr %s280, 16
        %s285 = sadd.s32 %s283, %s284
        %s286 = smul.addr %s285, 4
        %s287 = scalar_lea.vmem %s2, %s286
        %p288 = pneg %p110
        %p289 = pneg %p107
        %p290 = pneg %p131
        %p291 = pneg %p128
        %p292 = pneg %p152
        %p293 = pneg %p149
        %p294 = pneg %p180
        %p295 = pneg %p177
        %s296 = sand.u32 %s167, 1
        %s297 = scalar_lea.sflag [#allocation3], %s296
        %s298 = sand.u32 %s167, 1
        %s299 = smul.addr %s298, 32
        %s300 = scalar_lea.vmem [#allocation2], %s299
        %s301 = smul.u32 8, %s24
        %p302 = scmp.lt.s32.totalorder %s23, 1
        %s303 = scalar_select %p302, %s23, 1
        %p304 = scmp.lt.s32.totalorder %s301, 7
        %s305 = scalar_select %p304, %s301, 7
        %s306 = smul.addr %s305, 2
        %s307 = smul.addr %s303, 16
        %s308 = sadd.s32 %s306, %s307
        %s309 = smul.addr %s308, 4
        %s310 = scalar_lea.vmem %s0, %s309
        %s311 = smul.u32 8, %s24
        %s312 = smul.u32 8, %s24
        %p313 = scmp.lt.s32.totalorder %s23, 1
        %s314 = scalar_select %p313, %s23, 1
        %p315 = scmp.lt.s32.totalorder %s312, 7
        %s316 = scalar_select %p315, %s312, 7
        %s317 = smul.addr %s316, 2
        %s318 = smul.addr %s314, 16
        %s319 = sadd.s32 %s317, %s318
        %s320 = smul.addr %s319, 4
        %s321 = scalar_lea.vmem %s1, %s320
        %s322 = smul.u32 8, %s24
        %s323 = smul.u32 8, %s24
        %p324 = scmp.lt.s32.totalorder %s23, 1
        %s325 = scalar_select %p324, %s23, 1
        %p326 = scmp.lt.s32.totalorder %s323, 7
        %s327 = scalar_select %p326, %s323, 7
        %s328 = smul.addr %s327, 2
        %s329 = smul.addr %s325, 16
        %s330 = sadd.s32 %s328, %s329
        %s331 = smul.addr %s330, 4
        %s332 = scalar_lea.vmem %s2, %s331
        %s333 = smul.u32 8, %s24
        %s334 = smul.u32 8, %s24
        %v336 = vld [vmem:[%s321] sm:$0xf]
        %v337 = vld [vmem:[%s321 + $0x8] sm:$0xf]
        %v338 = vld [vmem:[%s321 + $0x10] sm:$0xf]
        %v339 = vld [vmem:[%s321 + $0x18] sm:$0xf]
        %v340 = vld [vmem:[%s321 + $0x20] sm:$0xf]
        %v341 = vld [vmem:[%s321 + $0x28] sm:$0xf]
        %v342 = vld [vmem:[%s321 + $0x30] sm:$0xf]
        %v343 = vld [vmem:[%s321 + $0x38] sm:$0xf]
        %v344 = vld [vmem:[%s321 + $0x4] sm:$0x1]
        %v345 = vld [vmem:[%s321 + $0xc] sm:$0x1]
        %v346 = vld [vmem:[%s321 + $0x14] sm:$0x1]
        %v347 = vld [vmem:[%s321 + $0x1c] sm:$0x1]
        %v348 = vld [vmem:[%s321 + $0x24] sm:$0x1]
        %v349 = vld [vmem:[%s321 + $0x2c] sm:$0x1]
        %v350 = vld [vmem:[%s321 + $0x34] sm:$0x1]
        %v351 = vld [vmem:[%s321 + $0x3c] sm:$0x1]
        %vm352 = vsmask.f32 3328
        %vm353 = vsmask.f32 7440
        %vm354 = vmor %vm352, %vm353
        %v356 = vshrl.u32 %v336, 16
        %v358 = vrot.slane %v356, 4
        %v359 = vshll.u32 %v336, 16
        %v361 = vrot.slane %v359, 5
        %v362 = vor.u32 %v358, %v361
        %v363 = vrot.slane %v362, 4
        %v365 = vshll.u32 %v344, 16
        %v367 = vrot.slane %v365, 5
        %v368 = vsel %vm354, %v363, %v367
        %v370 = vshrl.u32 %v337, 16
        %v372 = vrot.slane %v370, 4
        %v373 = vshll.u32 %v337, 16
        %v375 = vrot.slane %v373, 5
        %v376 = vor.u32 %v372, %v375
        %v377 = vrot.slane %v376, 4
        %v379 = vshll.u32 %v345, 16
        %v381 = vrot.slane %v379, 5
        %v382 = vsel %vm354, %v377, %v381
        %v384 = vshrl.u32 %v338, 16
        %v386 = vrot.slane %v384, 4
        %v387 = vshll.u32 %v338, 16
        %v389 = vrot.slane %v387, 5
        %v390 = vor.u32 %v386, %v389
        %v391 = vrot.slane %v390, 4
        %v393 = vshll.u32 %v346, 16
        %v395 = vrot.slane %v393, 5
        %v396 = vsel %vm354, %v391, %v395
        %v398 = vshrl.u32 %v339, 16
        %v400 = vrot.slane %v398, 4
        %v401 = vshll.u32 %v339, 16
        %v403 = vrot.slane %v401, 5
        %v404 = vor.u32 %v400, %v403
        %v405 = vrot.slane %v404, 4
        %v407 = vshll.u32 %v347, 16
        %v409 = vrot.slane %v407, 5
        %v410 = vsel %vm354, %v405, %v409
        %v412 = vshrl.u32 %v340, 16
        %v414 = vrot.slane %v412, 4
        %v415 = vshll.u32 %v340, 16
        %v417 = vrot.slane %v415, 5
        %v418 = vor.u32 %v414, %v417
        %v419 = vrot.slane %v418, 4
        %v421 = vshll.u32 %v348, 16
        %v423 = vrot.slane %v421, 5
        %v424 = vsel %vm354, %v419, %v423
        %v426 = vshrl.u32 %v341, 16
        %v428 = vrot.slane %v426, 4
        %v429 = vshll.u32 %v341, 16
        %v431 = vrot.slane %v429, 5
        %v432 = vor.u32 %v428, %v431
        %v433 = vrot.slane %v432, 4
        %v435 = vshll.u32 %v349, 16
        %v437 = vrot.slane %v435, 5
        %v438 = vsel %vm354, %v433, %v437
        %v440 = vshrl.u32 %v342, 16
        %v442 = vrot.slane %v440, 4
        %v443 = vshll.u32 %v342, 16
        %v445 = vrot.slane %v443, 5
        %v446 = vor.u32 %v442, %v445
        %v447 = vrot.slane %v446, 4
        %v449 = vshll.u32 %v350, 16
        %v451 = vrot.slane %v449, 5
        %v452 = vsel %vm354, %v447, %v451
        %v454 = vshrl.u32 %v343, 16
        %v456 = vrot.slane %v454, 4
        %v457 = vshll.u32 %v343, 16
        %v459 = vrot.slane %v457, 5
        %v460 = vor.u32 %v456, %v459
        %v461 = vrot.slane %v460, 4
        %v463 = vshll.u32 %v351, 16
        %v465 = vrot.slane %v463, 5
        %v466 = vsel %vm354, %v461, %v465
        %v467 = vld [vmem:[%s310] sm:$0xf]
        %v468 = vld [vmem:[%s310 + $0x8] sm:$0xf]
        %v469 = vld [vmem:[%s310 + $0x10] sm:$0xf]
        %v470 = vld [vmem:[%s310 + $0x18] sm:$0xf]
        %v471 = vld [vmem:[%s310 + $0x20] sm:$0xf]
        %v472 = vld [vmem:[%s310 + $0x28] sm:$0xf]
        %v473 = vld [vmem:[%s310 + $0x30] sm:$0xf]
        %v474 = vld [vmem:[%s310 + $0x38] sm:$0xf]
        %v475 = vld [vmem:[%s310 + $0x4] sm:$0x1]
        %v476 = vld [vmem:[%s310 + $0xc] sm:$0x1]
        %v477 = vld [vmem:[%s310 + $0x14] sm:$0x1]
        %v478 = vld [vmem:[%s310 + $0x1c] sm:$0x1]
        %v479 = vld [vmem:[%s310 + $0x24] sm:$0x1]
        %v480 = vld [vmem:[%s310 + $0x2c] sm:$0x1]
        %v481 = vld [vmem:[%s310 + $0x34] sm:$0x1]
        %v482 = vld [vmem:[%s310 + $0x3c] sm:$0x1]
        %v484 = vshrl.u32 %v467, 16
        %v486 = vrot.slane %v484, 4
        %v487 = vshll.u32 %v467, 16
        %v489 = vrot.slane %v487, 5
        %v490 = vor.u32 %v486, %v489
        %v491 = vrot.slane %v490, 4
        %v493 = vshll.u32 %v475, 16
        %v495 = vrot.slane %v493, 5
        %v496 = vsel %vm354, %v491, %v495
        %v498 = vshrl.u32 %v468, 16
        %v500 = vrot.slane %v498, 4
        %v501 = vshll.u32 %v468, 16
        %v503 = vrot.slane %v501, 5
        %v504 = vor.u32 %v500, %v503
        %v505 = vrot.slane %v504, 4
        %v507 = vshll.u32 %v476, 16
        %v509 = vrot.slane %v507, 5
        %v510 = vsel %vm354, %v505, %v509
        %v512 = vshrl.u32 %v469, 16
        %v514 = vrot.slane %v512, 4
        %v515 = vshll.u32 %v469, 16
        %v517 = vrot.slane %v515, 5
        %v518 = vor.u32 %v514, %v517
        %v519 = vrot.slane %v518, 4
        %v521 = vshll.u32 %v477, 16
        %v523 = vrot.slane %v521, 5
        %v524 = vsel %vm354, %v519, %v523
        %v526 = vshrl.u32 %v470, 16
        %v528 = vrot.slane %v526, 4
        %v529 = vshll.u32 %v470, 16
        %v531 = vrot.slane %v529, 5
        %v532 = vor.u32 %v528, %v531
        %v533 = vrot.slane %v532, 4
        %v535 = vshll.u32 %v478, 16
        %v537 = vrot.slane %v535, 5
        %v538 = vsel %vm354, %v533, %v537
        %v540 = vshrl.u32 %v471, 16
        %v542 = vrot.slane %v540, 4
        %v543 = vshll.u32 %v471, 16
        %v545 = vrot.slane %v543, 5
        %v546 = vor.u32 %v542, %v545
        %v547 = vrot.slane %v546, 4
        %v549 = vshll.u32 %v479, 16
        %v551 = vrot.slane %v549, 5
        %v552 = vsel %vm354, %v547, %v551
        %v554 = vshrl.u32 %v472, 16
        %v556 = vrot.slane %v554, 4
        %v557 = vshll.u32 %v472, 16
        %v559 = vrot.slane %v557, 5
        %v560 = vor.u32 %v556, %v559
        %v561 = vrot.slane %v560, 4
        %v563 = vshll.u32 %v480, 16
        %v565 = vrot.slane %v563, 5
        %v566 = vsel %vm354, %v561, %v565
        %v568 = vshrl.u32 %v473, 16
        %v570 = vrot.slane %v568, 4
        %v571 = vshll.u32 %v473, 16
        %v573 = vrot.slane %v571, 5
        %v574 = vor.u32 %v570, %v573
        %v575 = vrot.slane %v574, 4
        %v577 = vshll.u32 %v481, 16
        %v579 = vrot.slane %v577, 5
        %v580 = vsel %vm354, %v575, %v579
        %v582 = vshrl.u32 %v474, 16
        %v584 = vrot.slane %v582, 4
        %v585 = vshll.u32 %v474, 16
        %v587 = vrot.slane %v585, 5
        %v588 = vor.u32 %v584, %v587
        %v589 = vrot.slane %v588, 4
        %v591 = vshll.u32 %v482, 16
        %v593 = vrot.slane %v591, 5
        %v594 = vsel %vm354, %v589, %v593
        %v595 = vld [vmem:[%s332] sm:$0xf]
        %v596 = vld [vmem:[%s332 + $0x8] sm:$0xf]
        %v597 = vld [vmem:[%s332 + $0x10] sm:$0xf]
        %v598 = vld [vmem:[%s332 + $0x18] sm:$0xf]
        %v599 = vld [vmem:[%s332 + $0x20] sm:$0xf]
        %v600 = vld [vmem:[%s332 + $0x28] sm:$0xf]
        %v601 = vld [vmem:[%s332 + $0x30] sm:$0xf]
        %v602 = vld [vmem:[%s332 + $0x38] sm:$0xf]
        %v603 = vld [vmem:[%s332 + $0x4] sm:$0x1]
        %v604 = vld [vmem:[%s332 + $0xc] sm:$0x1]
        %v605 = vld [vmem:[%s332 + $0x14] sm:$0x1]
        %v606 = vld [vmem:[%s332 + $0x1c] sm:$0x1]
        %v607 = vld [vmem:[%s332 + $0x24] sm:$0x1]
        %v608 = vld [vmem:[%s332 + $0x2c] sm:$0x1]
        %v609 = vld [vmem:[%s332 + $0x34] sm:$0x1]
        %v610 = vld [vmem:[%s332 + $0x3c] sm:$0x1]
        %v612 = vshrl.u32 %v595, 16
        %v614 = vrot.slane %v612, 4
        %v615 = vshll.u32 %v595, 16
        %v617 = vrot.slane %v615, 5
        %v618 = vor.u32 %v614, %v617
        %v619 = vrot.slane %v618, 4
        %v621 = vshll.u32 %v603, 16
        %v623 = vrot.slane %v621, 5
        %v624 = vsel %vm354, %v619, %v623
        %v626 = vshrl.u32 %v596, 16
        %v628 = vrot.slane %v626, 4
        %v629 = vshll.u32 %v596, 16
        %v631 = vrot.slane %v629, 5
        %v632 = vor.u32 %v628, %v631
        %v633 = vrot.slane %v632, 4
        %v635 = vshll.u32 %v604, 16
        %v637 = vrot.slane %v635, 5
        %v638 = vsel %vm354, %v633, %v637
        %v640 = vshrl.u32 %v597, 16
        %v642 = vrot.slane %v640, 4
        %v643 = vshll.u32 %v597, 16
        %v645 = vrot.slane %v643, 5
        %v646 = vor.u32 %v642, %v645
        %v647 = vrot.slane %v646, 4
        %v649 = vshll.u32 %v605, 16
        %v651 = vrot.slane %v649, 5
        %v652 = vsel %vm354, %v647, %v651
        %v654 = vshrl.u32 %v598, 16
        %v656 = vrot.slane %v654, 4
        %v657 = vshll.u32 %v598, 16
        %v659 = vrot.slane %v657, 5
        %v660 = vor.u32 %v656, %v659
        %v661 = vrot.slane %v660, 4
        %v663 = vshll.u32 %v606, 16
        %v665 = vrot.slane %v663, 5
        %v666 = vsel %vm354, %v661, %v665
        %v668 = vshrl.u32 %v599, 16
        %v670 = vrot.slane %v668, 4
        %v671 = vshll.u32 %v599, 16
        %v673 = vrot.slane %v671, 5
        %v674 = vor.u32 %v670, %v673
        %v675 = vrot.slane %v674, 4
        %v677 = vshll.u32 %v607, 16
        %v679 = vrot.slane %v677, 5
        %v680 = vsel %vm354, %v675, %v679
        %v682 = vshrl.u32 %v600, 16
        %v684 = vrot.slane %v682, 4
        %v685 = vshll.u32 %v600, 16
        %v687 = vrot.slane %v685, 5
        %v688 = vor.u32 %v684, %v687
        %v689 = vrot.slane %v688, 4
        %v691 = vshll.u32 %v608, 16
        %v693 = vrot.slane %v691, 5
        %v694 = vsel %vm354, %v689, %v693
        %v696 = vshrl.u32 %v601, 16
        %v698 = vrot.slane %v696, 4
        %v699 = vshll.u32 %v601, 16
        %v701 = vrot.slane %v699, 5
        %v702 = vor.u32 %v698, %v701
        %v703 = vrot.slane %v702, 4
        %v705 = vshll.u32 %v609, 16
        %v707 = vrot.slane %v705, 5
        %v708 = vsel %vm354, %v703, %v707
        %v710 = vshrl.u32 %v602, 16
        %v712 = vrot.slane %v710, 4
        %v713 = vshll.u32 %v602, 16
        %v715 = vrot.slane %v713, 5
        %v716 = vor.u32 %v712, %v715
        %v717 = vrot.slane %v716, 4
        %v719 = vshll.u32 %v610, 16
        %v721 = vrot.slane %v719, 5
        %v722 = vsel %vm354, %v717, %v721
        %v731 = vunpack.c.l.b16 %v336
        %v732 = vunpack.c.l.b16 %v337
        %v733 = vunpack.c.l.b16 %v338
        %v734 = vunpack.c.l.b16 %v339
        %v735 = vunpack.c.l.b16 %v340
        %v736 = vunpack.c.l.b16 %v341
        %v737 = vunpack.c.l.b16 %v342
        %v738 = vunpack.c.l.b16 %v343
        %v739 = vpack.c.b16 %v732, %v731
        %v740 = vpack.c.b16 %v734, %v733
        %v741 = vpack.c.b16 %v736, %v735
        %v742 = vpack.c.b16 %v738, %v737
        %v747 = vunpack.c.l.b16 %v368
        %v748 = vunpack.c.l.b16 %v382
        %v749 = vunpack.c.l.b16 %v396
        %v750 = vunpack.c.l.b16 %v410
        %v751 = vunpack.c.l.b16 %v424
        %v752 = vunpack.c.l.b16 %v438
        %v753 = vunpack.c.l.b16 %v452
        %v754 = vunpack.c.l.b16 %v466
        %v755 = vpack.c.b16 %v748, %v747
        %v756 = vpack.c.b16 %v750, %v749
        %v757 = vpack.c.b16 %v752, %v751
        %v758 = vpack.c.b16 %v754, %v753
        %v771 = vunpack.c.l.b16 %v467
        %v772 = vunpack.c.l.b16 %v468
        %v773 = vunpack.c.l.b16 %v469
        %v774 = vunpack.c.l.b16 %v470
        %v775 = vunpack.c.l.b16 %v471
        %v776 = vunpack.c.l.b16 %v472
        %v777 = vunpack.c.l.b16 %v473
        %v778 = vunpack.c.l.b16 %v474
        %v779 = vpack.c.b16 %v772, %v771
        %v780 = vpack.c.b16 %v774, %v773
        %v781 = vpack.c.b16 %v776, %v775
        %v782 = vpack.c.b16 %v778, %v777
        %v787 = vunpack.c.l.b16 %v496
        %v788 = vunpack.c.l.b16 %v510
        %v789 = vunpack.c.l.b16 %v524
        %v790 = vunpack.c.l.b16 %v538
        %v791 = vunpack.c.l.b16 %v552
        %v792 = vunpack.c.l.b16 %v566
        %v793 = vunpack.c.l.b16 %v580
        %v794 = vunpack.c.l.b16 %v594
        %v795 = vpack.c.b16 %v788, %v787
        %v796 = vpack.c.b16 %v790, %v789
        %v797 = vpack.c.b16 %v792, %v791
        %v798 = vpack.c.b16 %v794, %v793
        %v811 = vunpack.c.l.b16 %v595
        %v812 = vunpack.c.l.b16 %v596
        %v813 = vunpack.c.l.b16 %v597
        %v814 = vunpack.c.l.b16 %v598
        %v815 = vunpack.c.l.b16 %v599
        %v816 = vunpack.c.l.b16 %v600
        %v817 = vunpack.c.l.b16 %v601
        %v818 = vunpack.c.l.b16 %v602
        %v819 = vpack.c.b16 %v812, %v811
        %v820 = vpack.c.b16 %v814, %v813
        %v821 = vpack.c.b16 %v816, %v815
        %v822 = vpack.c.b16 %v818, %v817
        %v827 = vunpack.c.l.b16 %v624
        %v828 = vunpack.c.l.b16 %v638
        %v829 = vunpack.c.l.b16 %v652
        %v830 = vunpack.c.l.b16 %v666
        %v831 = vunpack.c.l.b16 %v680
        %v832 = vunpack.c.l.b16 %v694
        %v833 = vunpack.c.l.b16 %v708
        %v834 = vunpack.c.l.b16 %v722
        %v835 = vpack.c.b16 %v828, %v827
        %v836 = vpack.c.b16 %v830, %v829
        %v837 = vpack.c.b16 %v832, %v831
        %v838 = vpack.c.b16 %v834, %v833
        %v843 = vld [vmem:[%s3] sm:$0xf]
        %v844 = vld [vmem:[%s3 + $0x4] sm:$0xf]
        %v845 = vld [vmem:[%s3 + $0x8] sm:$0xf]
        %v846 = vld [vmem:[%s3 + $0xc] sm:$0xf]
        %v847 = vld [vmem:[%s3 + $0x10] sm:$0xf]
        %v848 = vld [vmem:[%s3 + $0x14] sm:$0xf]
        %v849 = vld [vmem:[%s3 + $0x18] sm:$0xf]
        %v850 = vld [vmem:[%s3 + $0x1c] sm:$0xf]
        %v851 = vld [vmem:[%s3 + $0x20] sm:$0xf]
        %v852 = vld [vmem:[%s3 + $0x24] sm:$0xf]
        %v853 = vld [vmem:[%s3 + $0x28] sm:$0xf]
        %v854 = vld [vmem:[%s3 + $0x2c] sm:$0xf]
        %v855 = vld [vmem:[%s3 + $0x30] sm:$0xf]
        %v856 = vld [vmem:[%s3 + $0x34] sm:$0xf]
        %v857 = vld [vmem:[%s3 + $0x38] sm:$0xf]
        %v858 = vld [vmem:[%s3 + $0x3c] sm:$0xf]
        %v859 = vld [vmem:[%s3 + $0x40] sm:$0xf]
        %v860 = vld [vmem:[%s3 + $0x44] sm:$0xf]
        %v861 = vld [vmem:[%s3 + $0x48] sm:$0xf]
        %v862 = vld [vmem:[%s3 + $0x4c] sm:$0xf]
        %v863 = vld [vmem:[%s3 + $0x50] sm:$0xf]
        %v864 = vld [vmem:[%s3 + $0x54] sm:$0xf]
        %v865 = vld [vmem:[%s3 + $0x58] sm:$0xf]
        %v866 = vld [vmem:[%s3 + $0x5c] sm:$0xf]
        %v867 = vld [vmem:[%s3 + $0x60] sm:$0xf]
        %v868 = vld [vmem:[%s3 + $0x64] sm:$0xf]
        %v869 = vld [vmem:[%s3 + $0x68] sm:$0xf]
        %v870 = vld [vmem:[%s3 + $0x6c] sm:$0xf]
        %v871 = vld [vmem:[%s3 + $0x70] sm:$0xf]
        %v872 = vld [vmem:[%s3 + $0x74] sm:$0xf]
        %v873 = vld [vmem:[%s3 + $0x78] sm:$0xf]
        %v874 = vld [vmem:[%s3 + $0x7c] sm:$0xf]
        %v875 = vld [vmem:[%s3 + $0x80] sm:$0xf]
        %v876 = vld [vmem:[%s3 + $0x84] sm:$0xf]
        %v877 = vld [vmem:[%s3 + $0x88] sm:$0xf]
        %v878 = vld [vmem:[%s3 + $0x8c] sm:$0xf]
        %v879 = vld [vmem:[%s3 + $0x90] sm:$0xf]
        %v880 = vld [vmem:[%s3 + $0x94] sm:$0xf]
        %v881 = vld [vmem:[%s3 + $0x98] sm:$0xf]
        %v882 = vld [vmem:[%s3 + $0x9c] sm:$0xf]
        %v883 = vld [vmem:[%s3 + $0xa0] sm:$0xf]
        %v884 = vld [vmem:[%s3 + $0xa4] sm:$0xf]
        %v885 = vld [vmem:[%s3 + $0xa8] sm:$0xf]
        %v886 = vld [vmem:[%s3 + $0xac] sm:$0xf]
        %v887 = vld [vmem:[%s3 + $0xb0] sm:$0xf]
        %v888 = vld [vmem:[%s3 + $0xb4] sm:$0xf]
        %v889 = vld [vmem:[%s3 + $0xb8] sm:$0xf]
        %v890 = vld [vmem:[%s3 + $0xbc] sm:$0xf]
        %v891 = vld [vmem:[%s3 + $0xc0] sm:$0xf]
        %v892 = vld [vmem:[%s3 + $0xc4] sm:$0xf]
        %v893 = vld [vmem:[%s3 + $0xc8] sm:$0xf]
        %v894 = vld [vmem:[%s3 + $0xcc] sm:$0xf]
        %v895 = vld [vmem:[%s3 + $0xd0] sm:$0xf]
        %v896 = vld [vmem:[%s3 + $0xd4] sm:$0xf]
        %v897 = vld [vmem:[%s3 + $0xd8] sm:$0xf]
        %v898 = vld [vmem:[%s3 + $0xdc] sm:$0xf]
        %v899 = vld [vmem:[%s3 + $0xe0] sm:$0xf]
        %v900 = vld [vmem:[%s3 + $0xe4] sm:$0xf]
        %v901 = vld [vmem:[%s3 + $0xe8] sm:$0xf]
        %v902 = vld [vmem:[%s3 + $0xec] sm:$0xf]
        %v903 = vld [vmem:[%s3 + $0xf0] sm:$0xf]
        %v904 = vld [vmem:[%s3 + $0xf4] sm:$0xf]
        %v905 = vld [vmem:[%s3 + $0xf8] sm:$0xf]
        %v906 = vld [vmem:[%s3 + $0xfc] sm:$0xf]
        %v907 = vld [vmem:[%s3 + $0x100] sm:$0xf]
        %v908 = vld [vmem:[%s3 + $0x104] sm:$0xf]
        %v909 = vld [vmem:[%s3 + $0x108] sm:$0xf]
        %v910 = vld [vmem:[%s3 + $0x10c] sm:$0xf]
        %v911 = vld [vmem:[%s3 + $0x110] sm:$0xf]
        %v912 = vld [vmem:[%s3 + $0x114] sm:$0xf]
        %v913 = vld [vmem:[%s3 + $0x118] sm:$0xf]
        %v914 = vld [vmem:[%s3 + $0x11c] sm:$0xf]
        %v915 = vld [vmem:[%s3 + $0x120] sm:$0xf]
        %v916 = vld [vmem:[%s3 + $0x124] sm:$0xf]
        %v917 = vld [vmem:[%s3 + $0x128] sm:$0xf]
        %v918 = vld [vmem:[%s3 + $0x12c] sm:$0xf]
        %v919 = vld [vmem:[%s3 + $0x130] sm:$0xf]
        %v920 = vld [vmem:[%s3 + $0x134] sm:$0xf]
        %v921 = vld [vmem:[%s3 + $0x138] sm:$0xf]
        %v922 = vld [vmem:[%s3 + $0x13c] sm:$0xf]
        %v923 = vld [vmem:[%s3 + $0x140] sm:$0xf]
        %v924 = vld [vmem:[%s3 + $0x144] sm:$0xf]
        %v925 = vld [vmem:[%s3 + $0x148] sm:$0xf]
        %v926 = vld [vmem:[%s3 + $0x14c] sm:$0xf]
        %v927 = vld [vmem:[%s3 + $0x150] sm:$0xf]
        %v928 = vld [vmem:[%s3 + $0x154] sm:$0xf]
        %v929 = vld [vmem:[%s3 + $0x158] sm:$0xf]
        %v930 = vld [vmem:[%s3 + $0x15c] sm:$0xf]
        %v931 = vld [vmem:[%s3 + $0x160] sm:$0xf]
        %v932 = vld [vmem:[%s3 + $0x164] sm:$0xf]
        %v933 = vld [vmem:[%s3 + $0x168] sm:$0xf]
        %v934 = vld [vmem:[%s3 + $0x16c] sm:$0xf]
        %v935 = vld [vmem:[%s3 + $0x170] sm:$0xf]
        %v936 = vld [vmem:[%s3 + $0x174] sm:$0xf]
        %v937 = vld [vmem:[%s3 + $0x178] sm:$0xf]
        %v938 = vld [vmem:[%s3 + $0x17c] sm:$0xf]
        %v939 = vld [vmem:[%s4] sm:$0x1]
        %v941 = vlaneseq
        %v942 = vshrl.u32 %v941, 7
        %v943 = vsub.s32 0, %v942
        %v944 = vrot.slane %v939, %v943
        %v1042 = vunpack.c.l.b16 %v843
        %v1043 = vunpack.c.l.b16 %v844
        %v1044 = vunpack.c.l.b16 %v845
        %v1045 = vunpack.c.l.b16 %v846
        %v1046 = vunpack.c.l.b16 %v847
        %v1047 = vunpack.c.l.b16 %v848
        %v1048 = vunpack.c.l.b16 %v849
        %v1049 = vunpack.c.l.b16 %v850
        %v1050 = vunpack.c.l.b16 %v851
        %v1051 = vunpack.c.l.b16 %v852
        %v1052 = vunpack.c.l.b16 %v853
        %v1053 = vunpack.c.l.b16 %v854
        %v1054 = vunpack.c.l.b16 %v855
        %v1055 = vunpack.c.l.b16 %v856
        %v1056 = vunpack.c.l.b16 %v857
        %v1057 = vunpack.c.l.b16 %v858
        %v1058 = vunpack.c.l.b16 %v859
        %v1059 = vunpack.c.l.b16 %v860
        %v1060 = vunpack.c.l.b16 %v861
        %v1061 = vunpack.c.l.b16 %v862
        %v1062 = vunpack.c.l.b16 %v863
        %v1063 = vunpack.c.l.b16 %v864
        %v1064 = vunpack.c.l.b16 %v865
        %v1065 = vunpack.c.l.b16 %v866
        %v1066 = vunpack.c.l.b16 %v867
        %v1067 = vunpack.c.l.b16 %v868
        %v1068 = vunpack.c.l.b16 %v869
        %v1069 = vunpack.c.l.b16 %v870
        %v1070 = vunpack.c.l.b16 %v871
        %v1071 = vunpack.c.l.b16 %v872
        %v1072 = vunpack.c.l.b16 %v873
        %v1073 = vunpack.c.l.b16 %v874
        %v1074 = vunpack.c.l.b16 %v875
        %v1075 = vunpack.c.l.b16 %v876
        %v1076 = vunpack.c.l.b16 %v877
        %v1077 = vunpack.c.l.b16 %v878
        %v1078 = vunpack.c.l.b16 %v879
        %v1079 = vunpack.c.l.b16 %v880
        %v1080 = vunpack.c.l.b16 %v881
        %v1081 = vunpack.c.l.b16 %v882
        %v1082 = vunpack.c.l.b16 %v883
        %v1083 = vunpack.c.l.b16 %v884
        %v1084 = vunpack.c.l.b16 %v885
        %v1085 = vunpack.c.l.b16 %v886
        %v1086 = vunpack.c.l.b16 %v887
        %v1087 = vunpack.c.l.b16 %v888
        %v1088 = vunpack.c.l.b16 %v889
        %v1089 = vunpack.c.l.b16 %v890
        %v1090 = vunpack.c.l.b16 %v891
        %v1091 = vunpack.c.l.b16 %v892
        %v1092 = vunpack.c.l.b16 %v893
        %v1093 = vunpack.c.l.b16 %v894
        %v1094 = vunpack.c.l.b16 %v895
        %v1095 = vunpack.c.l.b16 %v896
        %v1096 = vunpack.c.l.b16 %v897
        %v1097 = vunpack.c.l.b16 %v898
        %v1098 = vunpack.c.l.b16 %v899
        %v1099 = vunpack.c.l.b16 %v900
        %v1100 = vunpack.c.l.b16 %v901
        %v1101 = vunpack.c.l.b16 %v902
        %v1102 = vunpack.c.l.b16 %v903
        %v1103 = vunpack.c.l.b16 %v904
        %v1104 = vunpack.c.l.b16 %v905
        %v1105 = vunpack.c.l.b16 %v906
        %v1106 = vunpack.c.l.b16 %v907
        %v1107 = vunpack.c.l.b16 %v908
        %v1108 = vunpack.c.l.b16 %v909
        %v1109 = vunpack.c.l.b16 %v910
        %v1110 = vunpack.c.l.b16 %v911
        %v1111 = vunpack.c.l.b16 %v912
        %v1112 = vunpack.c.l.b16 %v913
        %v1113 = vunpack.c.l.b16 %v914
        %v1114 = vunpack.c.l.b16 %v915
        %v1115 = vunpack.c.l.b16 %v916
        %v1116 = vunpack.c.l.b16 %v917
        %v1117 = vunpack.c.l.b16 %v918
        %v1118 = vunpack.c.l.b16 %v919
        %v1119 = vunpack.c.l.b16 %v920
        %v1120 = vunpack.c.l.b16 %v921
        %v1121 = vunpack.c.l.b16 %v922
        %v1122 = vunpack.c.l.b16 %v923
        %v1123 = vunpack.c.l.b16 %v924
        %v1124 = vunpack.c.l.b16 %v925
        %v1125 = vunpack.c.l.b16 %v926
        %v1126 = vunpack.c.l.b16 %v927
        %v1127 = vunpack.c.l.b16 %v928
        %v1128 = vunpack.c.l.b16 %v929
        %v1129 = vunpack.c.l.b16 %v930
        %v1130 = vunpack.c.l.b16 %v931
        %v1131 = vunpack.c.l.b16 %v932
        %v1132 = vunpack.c.l.b16 %v933
        %v1133 = vunpack.c.l.b16 %v934
        %v1134 = vunpack.c.l.b16 %v935
        %v1135 = vunpack.c.l.b16 %v936
        %v1136 = vunpack.c.l.b16 %v937
        %v1137 = vunpack.c.l.b16 %v938
        %v1138 = vpack.c.b16 %v1043, %v1042
        %v1139 = vpack.c.b16 %v1045, %v1044
        %v1140 = vpack.c.b16 %v1047, %v1046
        %v1141 = vpack.c.b16 %v1049, %v1048
        %v1142 = vpack.c.b16 %v1051, %v1050
        %v1143 = vpack.c.b16 %v1053, %v1052
        %v1144 = vpack.c.b16 %v1055, %v1054
        %v1145 = vpack.c.b16 %v1057, %v1056
        %v1146 = vpack.c.b16 %v1059, %v1058
        %v1147 = vpack.c.b16 %v1061, %v1060
        %v1148 = vpack.c.b16 %v1063, %v1062
        %v1149 = vpack.c.b16 %v1065, %v1064
        %v1150 = vpack.c.b16 %v1067, %v1066
        %v1151 = vpack.c.b16 %v1069, %v1068
        %v1152 = vpack.c.b16 %v1071, %v1070
        %v1153 = vpack.c.b16 %v1073, %v1072
        %v1154 = vpack.c.b16 %v1075, %v1074
        %v1155 = vpack.c.b16 %v1077, %v1076
        %v1156 = vpack.c.b16 %v1079, %v1078
        %v1157 = vpack.c.b16 %v1081, %v1080
        %v1158 = vpack.c.b16 %v1083, %v1082
        %v1159 = vpack.c.b16 %v1085, %v1084
        %v1160 = vpack.c.b16 %v1087, %v1086
        %v1161 = vpack.c.b16 %v1089, %v1088
        %v1162 = vpack.c.b16 %v1091, %v1090
        %v1163 = vpack.c.b16 %v1093, %v1092
        %v1164 = vpack.c.b16 %v1095, %v1094
        %v1165 = vpack.c.b16 %v1097, %v1096
        %v1166 = vpack.c.b16 %v1099, %v1098
        %v1167 = vpack.c.b16 %v1101, %v1100
        %v1168 = vpack.c.b16 %v1103, %v1102
        %v1169 = vpack.c.b16 %v1105, %v1104
        %v1170 = vpack.c.b16 %v1107, %v1106
        %v1171 = vpack.c.b16 %v1109, %v1108
        %v1172 = vpack.c.b16 %v1111, %v1110
        %v1173 = vpack.c.b16 %v1113, %v1112
        %v1174 = vpack.c.b16 %v1115, %v1114
        %v1175 = vpack.c.b16 %v1117, %v1116
        %v1176 = vpack.c.b16 %v1119, %v1118
        %v1177 = vpack.c.b16 %v1121, %v1120
        %v1178 = vpack.c.b16 %v1123, %v1122
        %v1179 = vpack.c.b16 %v1125, %v1124
        %v1180 = vpack.c.b16 %v1127, %v1126
        %v1181 = vpack.c.b16 %v1129, %v1128
        %v1182 = vpack.c.b16 %v1131, %v1130
        %v1183 = vpack.c.b16 %v1133, %v1132
        %v1184 = vpack.c.b16 %v1135, %v1134
        %v1185 = vpack.c.b16 %v1137, %v1136
        %1234 = vmatprep.subr.bf16.mxu0 0
        %1235 = vmatpush1.bf16.msra.mxu0 %v1138
        %1236 = vmatprep.subr.bf16.mxu0 0
        %1237 = vmatpush1.bf16.msra.mxu0 %v1139
        %1238 = vmatprep.subr.bf16.mxu0 0
        %1239 = vmatpush1.bf16.msra.mxu0 %v1140
        %1240 = vmatprep.subr.bf16.mxu0 0
        %1241 = vmatpush1.bf16.msra.mxu0 %v1141
        %1242 = vmatprep.subr.bf16.mxu0 0
        %1243 = vmatpush1.bf16.msra.mxu0 %v1142
        %1244 = vmatprep.subr.bf16.mxu0 0
        %1245 = vmatpush1.bf16.msra.mxu0 %v1143
        %1246 = vmatprep.subr.bf16.mxu0 0
        %1247 = vmatpush1.bf16.msra.mxu0 %v1144
        %1248 = vmatprep.subr.bf16.mxu0 0
        %1249 = vmatpush1.bf16.msra.mxu0 %v1145
        %1250 = vmatprep.subr.bf16.mxu0 0
        %1251 = vmatpush1.bf16.msra.mxu0 %v1146
        %1252 = vmatprep.subr.bf16.mxu0 0
        %1253 = vmatpush1.bf16.msra.mxu0 %v1147
        %1254 = vmatprep.subr.bf16.mxu0 0
        %1255 = vmatpush1.bf16.msra.mxu0 %v1148
        %1256 = vmatprep.subr.bf16.mxu0 0
        %1257 = vmatpush1.bf16.msra.mxu0 %v1149
        %1258 = vmatprep.subr.bf16.mxu0 0
        %1259 = vmatpush1.bf16.msra.mxu0 %v1150
        %1260 = vmatprep.subr.bf16.mxu0 0
        %1261 = vmatpush1.bf16.msra.mxu0 %v1151
        %1262 = vmatprep.subr.bf16.mxu0 0
        %1263 = vmatpush1.bf16.msra.mxu0 %v1152
        %1264 = vmatprep.subr.bf16.mxu0 0
        %1265 = vmatpush1.bf16.msra.mxu0 %v1153
        %1266 = vmatprep.mubr.bf16.mxu0 %v755
        %1267 = vmatmul.mubr.bf16.gmra.mrb[0].mxu0 %v739
        %v1268 = vpop.f32.mrb[0].mxu0
        %v1269 = vadd.f32 %v944, %v1268
        %v1270 = vpop.f32.mrb[0].mxu0
        %v1271 = vpop.f32.mrb[0].mxu0
        %v1272 = vadd.f32 %v944, %v1271
        %v1273 = vpop.f32.mrb[0].mxu0
        %1274 = vmatprep.mubr.bf16.mxu0 %v756
        %1275 = vmatmul.mubr.bf16.gmra.mrb[0].mxu0 %v740
        %v1276 = vpop.f32.mrb[0].mxu0
        %v1277 = vadd.f32 %v944, %v1276
        %v1278 = vpop.f32.mrb[0].mxu0
        %v1279 = vpop.f32.mrb[0].mxu0
        %v1280 = vadd.f32 %v944, %v1279
        %v1281 = vpop.f32.mrb[0].mxu0
        %1282 = vmatprep.mubr.bf16.mxu0 %v757
        %1283 = vmatmul.mubr.bf16.gmra.mrb[0].mxu0 %v741
        %v1284 = vpop.f32.mrb[0].mxu0
        %v1285 = vadd.f32 %v944, %v1284
        %v1286 = vpop.f32.mrb[0].mxu0
        %v1287 = vpop.f32.mrb[0].mxu0
        %v1288 = vadd.f32 %v944, %v1287
        %v1289 = vpop.f32.mrb[0].mxu0
        %1290 = vmatprep.mubr.bf16.mxu0 %v758
        %1291 = vmatmul.mubr.bf16.gmra.mrb[0].mxu0 %v742
        %v1292 = vpop.f32.mrb[0].mxu0
        %v1293 = vadd.f32 %v944, %v1292
        %v1294 = vpop.f32.mrb[0].mxu0
        %v1295 = vpop.f32.mrb[0].mxu0
        %v1296 = vadd.f32 %v944, %v1295
        %v1297 = vpop.f32.mrb[0].mxu0
        %1298 = vdwg.mxu0
        %1299 = vmatprep.subr.bf16.mxu0 0
        %1300 = vmatpush1.bf16.msra.mxu0 %v1154
        %1301 = vmatprep.subr.bf16.mxu0 0
        %1302 = vmatpush1.bf16.msra.mxu0 %v1155
        %1303 = vmatprep.subr.bf16.mxu0 0
        %1304 = vmatpush1.bf16.msra.mxu0 %v1156
        %1305 = vmatprep.subr.bf16.mxu0 0
        %1306 = vmatpush1.bf16.msra.mxu0 %v1157
        %1307 = vmatprep.subr.bf16.mxu0 0
        %1308 = vmatpush1.bf16.msra.mxu0 %v1158
        %1309 = vmatprep.subr.bf16.mxu0 0
        %1310 = vmatpush1.bf16.msra.mxu0 %v1159
        %1311 = vmatprep.subr.bf16.mxu0 0
        %1312 = vmatpush1.bf16.msra.mxu0 %v1160
        %1313 = vmatprep.subr.bf16.mxu0 0
        %1314 = vmatpush1.bf16.msra.mxu0 %v1161
        %1315 = vmatprep.subr.bf16.mxu0 0
        %1316 = vmatpush1.bf16.msra.mxu0 %v1162
        %1317 = vmatprep.subr.bf16.mxu0 0
        %1318 = vmatpush1.bf16.msra.mxu0 %v1163
        %1319 = vmatprep.subr.bf16.mxu0 0
        %1320 = vmatpush1.bf16.msra.mxu0 %v1164
        %1321 = vmatprep.subr.bf16.mxu0 0
        %1322 = vmatpush1.bf16.msra.mxu0 %v1165
        %1323 = vmatprep.subr.bf16.mxu0 0
        %1324 = vmatpush1.bf16.msra.mxu0 %v1166
        %1325 = vmatprep.subr.bf16.mxu0 0
        %1326 = vmatpush1.bf16.msra.mxu0 %v1167
        %1327 = vmatprep.subr.bf16.mxu0 0
        %1328 = vmatpush1.bf16.msra.mxu0 %v1168
        %1329 = vmatprep.subr.bf16.mxu0 0
        %1330 = vmatpush1.bf16.msra.mxu0 %v1169
        %1331 = vmatprep.mubr.bf16.mxu0 %v795
        %1332 = vmatmul.mubr.bf16.gmra.mrb[0].mxu0 %v779
        %v1333 = vpop.f32.mrb[0].mxu0
        %v1334 = vadd.f32 %v1269, %v1333
        %v1335 = vpop.f32.mrb[0].mxu0
        %v1336 = vpop.f32.mrb[0].mxu0
        %v1337 = vadd.f32 %v1272, %v1336
        %v1338 = vpop.f32.mrb[0].mxu0
        %1339 = vmatprep.mubr.bf16.mxu0 %v796
        %1340 = vmatmul.mubr.bf16.gmra.mrb[0].mxu0 %v780
        %v1341 = vpop.f32.mrb[0].mxu0
        %v1342 = vadd.f32 %v1277, %v1341
        %v1343 = vpop.f32.mrb[0].mxu0
        %v1344 = vpop.f32.mrb[0].mxu0
        %v1345 = vadd.f32 %v1280, %v1344
        %v1346 = vpop.f32.mrb[0].mxu0
        %1347 = vmatprep.mubr.bf16.mxu0 %v797
        %1348 = vmatmul.mubr.bf16.gmra.mrb[0].mxu0 %v781
        %v1349 = vpop.f32.mrb[0].mxu0
        %v1350 = vadd.f32 %v1285, %v1349
        %v1351 = vpop.f32.mrb[0].mxu0
        %v1352 = vpop.f32.mrb[0].mxu0
        %v1353 = vadd.f32 %v1288, %v1352
        %v1354 = vpop.f32.mrb[0].mxu0
        %1355 = vmatprep.mubr.bf16.mxu0 %v798
        %1356 = vmatmul.mubr.bf16.gmra.mrb[0].mxu0 %v782
        %v1357 = vpop.f32.mrb[0].mxu0
        %v1358 = vadd.f32 %v1293, %v1357
        %v1359 = vpop.f32.mrb[0].mxu0
        %v1360 = vpop.f32.mrb[0].mxu0
        %v1361 = vadd.f32 %v1296, %v1360
        %v1362 = vpop.f32.mrb[0].mxu0
        %1363 = vdwg.mxu0
        %1364 = vmatprep.subr.bf16.mxu0 0
        %1365 = vmatpush1.bf16.msra.mxu0 %v1170
        %1366 = vmatprep.subr.bf16.mxu0 0
        %1367 = vmatpush1.bf16.msra.mxu0 %v1171
        %1368 = vmatprep.subr.bf16.mxu0 0
        %1369 = vmatpush1.bf16.msra.mxu0 %v1172
        %1370 = vmatprep.subr.bf16.mxu0 0
        %1371 = vmatpush1.bf16.msra.mxu0 %v1173
        %1372 = vmatprep.subr.bf16.mxu0 0
        %1373 = vmatpush1.bf16.msra.mxu0 %v1174
        %1374 = vmatprep.subr.bf16.mxu0 0
        %1375 = vmatpush1.bf16.msra.mxu0 %v1175
        %1376 = vmatprep.subr.bf16.mxu0 0
        %1377 = vmatpush1.bf16.msra.mxu0 %v1176
        %1378 = vmatprep.subr.bf16.mxu0 0
        %1379 = vmatpush1.bf16.msra.mxu0 %v1177
        %1380 = vmatprep.subr.bf16.mxu0 0
        %1381 = vmatpush1.bf16.msra.mxu0 %v1178
        %1382 = vmatprep.subr.bf16.mxu0 0
        %1383 = vmatpush1.bf16.msra.mxu0 %v1179
        %1384 = vmatprep.subr.bf16.mxu0 0
        %1385 = vmatpush1.bf16.msra.mxu0 %v1180
        %1386 = vmatprep.subr.bf16.mxu0 0
        %1387 = vmatpush1.bf16.msra.mxu0 %v1181
        %1388 = vmatprep.subr.bf16.mxu0 0
        %1389 = vmatpush1.bf16.msra.mxu0 %v1182
        %1390 = vmatprep.subr.bf16.mxu0 0
        %1391 = vmatpush1.bf16.msra.mxu0 %v1183
        %1392 = vmatprep.subr.bf16.mxu0 0
        %1393 = vmatpush1.bf16.msra.mxu0 %v1184
        %1394 = vmatprep.subr.bf16.mxu0 0
        %1395 = vmatpush1.bf16.msra.mxu0 %v1185
        %1396 = vmatprep.mubr.bf16.mxu0 %v835
        %1397 = vmatmul.mubr.bf16.gmra.mrb[0].mxu0 %v819
        %v1398 = vpop.f32.mrb[0].mxu0
        %v1399 = vadd.f32 %v1334, %v1398
        %v1400 = vpop.f32.mrb[0].mxu0
        %v1401 = vpop.f32.mrb[0].mxu0
        %v1402 = vadd.f32 %v1337, %v1401
        %v1403 = vpop.f32.mrb[0].mxu0
        %1404 = vmatprep.mubr.bf16.mxu0 %v836
        %1405 = vmatmul.mubr.bf16.gmra.mrb[0].mxu0 %v820
        %v1406 = vpop.f32.mrb[0].mxu0
        %v1407 = vadd.f32 %v1342, %v1406
        %v1408 = vpop.f32.mrb[0].mxu0
        %v1409 = vpop.f32.mrb[0].mxu0
        %v1410 = vadd.f32 %v1345, %v1409
        %v1411 = vpop.f32.mrb[0].mxu0
        %1412 = vmatprep.mubr.bf16.mxu0 %v837
        %1413 = vmatmul.mubr.bf16.gmra.mrb[0].mxu0 %v821
        %v1414 = vpop.f32.mrb[0].mxu0
        %v1415 = vadd.f32 %v1350, %v1414
        %v1416 = vpop.f32.mrb[0].mxu0
        %v1417 = vpop.f32.mrb[0].mxu0
        %v1418 = vadd.f32 %v1353, %v1417
        %v1419 = vpop.f32.mrb[0].mxu0
        %1420 = vmatprep.mubr.bf16.mxu0 %v838
        %1421 = vmatmul.mubr.bf16.gmra.mrb[0].mxu0 %v822
        %v1422 = vpop.f32.mrb[0].mxu0
        %v1423 = vadd.f32 %v1358, %v1422
        %v1424 = vpop.f32.mrb[0].mxu0
        %v1425 = vpop.f32.mrb[0].mxu0
        %v1426 = vadd.f32 %v1361, %v1425
        %v1427 = vpop.f32.mrb[0].mxu0
        %1428 = vdwg.mxu0
        %vm1429 = vcmp.gt.f32.partialorder %v1399, 0.0
        %vm1430 = vcmp.gt.f32.partialorder %v1402, 0.0
        %vm1431 = vcmp.gt.f32.partialorder %v1407, 0.0
        %vm1432 = vcmp.gt.f32.partialorder %v1410, 0.0
        %vm1433 = vcmp.gt.f32.partialorder %v1415, 0.0
        %vm1434 = vcmp.gt.f32.partialorder %v1418, 0.0
        %vm1435 = vcmp.gt.f32.partialorder %v1423, 0.0
        %vm1436 = vcmp.gt.f32.partialorder %v1426, 0.0
        %v1437 = vmul.f32 %v1399, 0.2
        %v1438 = vmul.f32 %v1402, 0.2
        %v1439 = vmul.f32 %v1407, 0.2
        %v1440 = vmul.f32 %v1410, 0.2
        %v1441 = vmul.f32 %v1415, 0.2
        %v1442 = vmul.f32 %v1418, 0.2
        %v1443 = vmul.f32 %v1423, 0.2
        %v1444 = vmul.f32 %v1426, 0.2
        %v1445 = vsel %vm1429, %v1399, %v1437
        %v1446 = vsel %vm1430, %v1402, %v1438
        %v1447 = vsel %vm1431, %v1407, %v1439
        %v1448 = vsel %vm1432, %v1410, %v1440
        %v1449 = vsel %vm1433, %v1415, %v1441
        %v1450 = vsel %vm1434, %v1418, %v1442
        %v1451 = vsel %vm1435, %v1423, %v1443
        %v1452 = vsel %vm1436, %v1426, %v1444
        %v1453 = vpack.c.bf16 %v1446, %v1445
        %v1454 = vpack.c.bf16 %v1448, %v1447
        %v1455 = vpack.c.bf16 %v1450, %v1449
        %v1456 = vpack.c.bf16 %v1452, %v1451
        %v1461 = vunpack.c.l.b16 %v1453
        %v1462 = vunpack.c.h.b16 %v1453
        %v1463 = vunpack.c.l.b16 %v1454
        %v1464 = vunpack.c.h.b16 %v1454
        %v1465 = vunpack.c.l.b16 %v1455
        %v1466 = vunpack.c.h.b16 %v1455
        %v1467 = vunpack.c.l.b16 %v1456
        %v1468 = vunpack.c.h.b16 %v1456
        %v1469 = vpack.c.b16 %v1461, %v1461
        %v1470 = vpack.c.b16 %v1462, %v1462
        %v1471 = vpack.c.b16 %v1463, %v1463
        %v1472 = vpack.c.b16 %v1464, %v1464
        %v1473 = vpack.c.b16 %v1465, %v1465
        %v1474 = vpack.c.b16 %v1466, %v1466
        %v1475 = vpack.c.b16 %v1467, %v1467
        %v1476 = vpack.c.b16 %v1468, %v1468
        %vm1485 = vcmask 519168
        %1486 = vst.msk [vmem:[%s300] sm:$0xf] %vm1485, %v1469
        %1487 = vst.msk [vmem:[%s300 + $0x4] sm:$0xf] %vm1485, %v1470
        %1488 = vst.msk [vmem:[%s300 + $0x8] sm:$0xf] %vm1485, %v1471
        %1489 = vst.msk [vmem:[%s300 + $0xc] sm:$0xf] %vm1485, %v1472
        %1490 = vst.msk [vmem:[%s300 + $0x10] sm:$0xf] %vm1485, %v1473
        %1491 = vst.msk [vmem:[%s300 + $0x14] sm:$0xf] %vm1485, %v1474
        %1492 = vst.msk [vmem:[%s300 + $0x18] sm:$0xf] %vm1485, %v1475
        %1493 = vst.msk [vmem:[%s300 + $0x1c] sm:$0xf] %vm1485, %v1476
        %s1494 = sand.u32 %s167, 1
        %s1495 = scalar_lea.sflag [#allocation3], %s1494
        %s1496 = sand.u32 %s167, 1
        %s1497 = smul.addr %s1496, 32
        %s1498 = scalar_lea.vmem [#allocation2], %s1497
        // Predicated region
        $region41: #{tpu_custom_call.1} parent=39 // pred_check
          %p1499 = pneg %p177
        $region42: #{tpu_custom_call.1} parent=39 // pred_check_branch
          %1501 = sbr.rel (%p1499) target = $region44
        $region43: #{tpu_custom_call.1} parent=39 // pred_region
          %s1502 = smul.u32 8, %s24
          %s1504 = ssub.s32 512, 512
          %1505 = vsyncadd %s1495, %s1504
          %s1506 = smul.addr %s23, 8
          %s1507 = sadd.s32 %s1502, %s1506
          %s1508 = smul.addr %s1507, 64
          %s1509 = scalar_lea.hbm %s5, %s1508
          %s1510 = sshll.u32 %s1498, 4
          %s1511 = int_to_ptr.vmem [resolvable:$true] %s1510
          %1516 = dma.vmem_to_hbm [thread:$0]  %s1511, 512, %s1509, %s1495, 64, 64, 4
        $region44: #{tpu_custom_call.1} parent=39 // pred_fallthru
          _
      $region40: #{tpu_custom_call.1} parent=5 // pred_fallthru
        _
      %p1517 = scmp.le.s32.totalorder 2, %s14
      // Predicated region
      $region45: #{tpu_custom_call.1} parent=5 // pred_check
        %p1518 = pneg %p1517
      $region46: #{tpu_custom_call.1} parent=5 // pred_check_branch
        %1520 = sbr.rel (%p1518) target = $region48
      $region47: #{tpu_custom_call.1} parent=5 // pred_region
        %s1521 = ssub.s32 %s14, 2
        // Predicated region
        $region49: #{tpu_custom_call.1} parent=47 // pred_check
          %p1522 = pneg %p183
        $region50: #{tpu_custom_call.1} parent=47 // pred_check_branch
          %1524 = sbr.rel (%p1522) target = $region52
        $region51: #{tpu_custom_call.1} parent=47 // pred_region
          %s1525 = sand.u32 %s168, 1
          %s1526 = scalar_lea.sflag [#allocation3], %s1525
          %s1527 = sand.u32 %s168, 1
          %s1528 = smul.addr %s1527, 32
          %s1529 = scalar_lea.vmem [#allocation2], %s1528
          %1530 = dma.done %s1526, 512
        $region52: #{tpu_custom_call.1} parent=47 // pred_fallthru
          _
      $region48: #{tpu_custom_call.1} parent=5 // pred_fallthru
        _
    $region6: #{tpu_custom_call.1} parent=1 // loop_footer
      %s18 = sadd.s32 1, %s14
    $region7: #{tpu_custom_call.1} parent=1 // loop_footer_branch
      %13 = sbr.rel target = $region3
    $region8: #{tpu_custom_call.1} parent=1 // loop_exit
      _
    %1531 = vsyncpa [#allocation3], 1
    %s1532 = scalar_lea.sflag [#allocation3], 1
    %1533 = vsyncpa %s1532, 1

</llo_original>
